<compile_context>
chip_gen: v6e
topology: v6e:2x2x1
jax: 0.10.0
libtpu: 0.0.40
codegen_flags: <defaults>
</compile_context>

<pallas_src>
import jax
import jax.numpy as jnp
from jax.experimental import pallas as pl
from jax.experimental.pallas import tpu as pltpu

K_IN = 32   # Linear in_features
N_OUT = 8   # Linear out_features


def _linear_add_kernel(x_ref, w_ref, o_ref):
    # w_ref is (33, 8): rows 0..31 = weight^T, row 32 = (bias + other1).
    # Offset 32 is a multiple of the 8-row sublane tile -> both slices are free.
    w = w_ref[pl.ds(0, K_IN), :]          # (32, 8)
    bo = w_ref[pl.ds(K_IN, 1), :]         # (1, 8), broadcasts over rows
    acc = jnp.dot(x_ref[...], w, preferred_element_type=jnp.float32)
    o_ref[...] = acc + bo


def linear_add(x1, w_aug):
    """Computes x1 @ weight^T + bias + other1 with the constants pre-folded
    into w_aug = concat([weight^T, bias + other1], axis=0)  -> (33, 8)."""
    M, K = x1.shape
    N = w_aug.shape[1]
    cost = pl.CostEstimate(
        flops=2 * M * K * N,
        transcendentals=0,
        bytes_accessed=(x1.size + w_aug.size + M * N) * 4,
    )
    return pl.pallas_call(
        _linear_add_kernel,
        out_shape=jax.ShapeDtypeStruct((M, N), jnp.float32),
        in_specs=[
            pl.BlockSpec(memory_space=pltpu.VMEM),
            pl.BlockSpec(memory_space=pltpu.VMEM),
        ],
        out_specs=pl.BlockSpec(memory_space=pltpu.VMEM),
        cost_estimate=cost,
    )(x1, w_aug)


if __name__ == "__main__":
    key = jax.random.PRNGKey(0)
    k_x, k_o, k_w, k_b = jax.random.split(key, 4)

    # Inputs matching the PyTorch module: x1 (10, 32), other1 (1, 8)
    x1 = jax.random.uniform(k_x, (10, K_IN), dtype=jnp.float32)
    other1 = jax.random.uniform(k_o, (1, N_OUT), dtype=jnp.float32)

    # Deterministic Linear(32, 8) parameters (PyTorch weight layout is (8, 32);
    # we keep the transpose (32, 8) for a direct x @ W^T matmul).
    bound = 1.0 / jnp.sqrt(float(K_IN))
    weight = jax.random.uniform(k_w, (N_OUT, K_IN), dtype=jnp.float32,
                                minval=-bound, maxval=bound)
    bias = jax.random.uniform(k_b, (1, N_OUT), dtype=jnp.float32,
                              minval=-bound, maxval=bound)

    # One-time host-side fold: weight^T with (bias + other1) as an extra row.
    w_aug = jnp.concatenate([weight.T, bias + other1], axis=0)  # (33, 8)

    out = linear_add(x1, w_aug)
    jax.block_until_ready(out)
    assert out.shape == (10, N_OUT)

    # f32 reference with the original module semantics: Linear(x1) + other1.
    ref_f32 = x1 @ weight.T + bias + other1
    assert jnp.allclose(out, ref_f32, atol=1e-4, rtol=1e-4), (
        jnp.max(jnp.abs(out - ref_f32)))

    print("KERNEL_OK")
</pallas_src>

<mosaic_0001>
module attributes {stable_mosaic.version = 11 : i64} {
  func.func @_linear_add_kernel(%arg0: memref<10x32xf32, #tpu.memory_space<vmem>>, %arg1: memref<33x8xf32, #tpu.memory_space<vmem>>, %arg2: memref<10x8xf32, #tpu.memory_space<vmem>>) attributes {dimension_semantics = [], scalar_prefetch = 0 : i64, scratch_operands = 0 : i64, tpu.core_type = #tpu.core_type<tc>} {
    %c0 = arith.constant 0 : index
    %c0_0 = arith.constant 0 : index
    %0 = vector.load %arg1[%c0, %c0_0] : memref<33x8xf32, #tpu.memory_space<vmem>>, vector<32x8xf32>
    %c32 = arith.constant 32 : index
    %c0_1 = arith.constant 0 : index
    %1 = vector.load %arg1[%c32, %c0_1] : memref<33x8xf32, #tpu.memory_space<vmem>>, vector<1x8xf32>
    %c0_2 = arith.constant 0 : index
    %c0_3 = arith.constant 0 : index
    %2 = vector.load %arg0[%c0_2, %c0_3] : memref<10x32xf32, #tpu.memory_space<vmem>>, vector<10x32xf32>
    %cst = arith.constant dense<0.000000e+00> : vector<10x8xf32>
    %3 = tpu.matmul %2, %0, %cst {dimension_numbers = #tpu.dot_dimension_numbers<[1], [0], [0], [1], [0, 0, 1, 1], [], []>} : vector<10x32xf32>, vector<32x8xf32>, vector<10x8xf32> -> vector<10x8xf32>
    %4 = vector.broadcast %1 : vector<1x8xf32> to vector<10x8xf32>
    %5 = arith.addf %3, %4 : vector<10x8xf32>
    %c0_4 = arith.constant 0 : index
    %c0_5 = arith.constant 0 : index
    %6 = vector.load %arg2[%c0_4, %c0_5] : memref<10x8xf32, #tpu.memory_space<vmem>>, vector<10x8xf32>
    tpu.vector_store %arg2[%c0_4, %c0_5], %5 {strides = array<i32>} : memref<10x8xf32, #tpu.memory_space<vmem>>, vector<10x8xf32>,
    return
  }
}

</mosaic_0001>

<llo_original>
// kernel: tpu_custom_call.1
$region0: #{tpu_custom_call.1}
  #allocation0 [shape = 'u32[]', space=smem, size = 0x4, offset = 0x4, fixed_abs, tag = 'smem constant byte address 0x4 - core index']
  #allocation1 [shape = 'u32[144,128]{1,0:T(1,128)}', space=vmem, size = 0x12000, scoped, tag = 'internal scratch']
  %s0 = inlined_call_operand.vmem [shape: f32[10,32], index: 0, kind: input, shape index: {}]
  %s1 = inlined_call_operand.vmem [shape: f32[33,8], index: 1, kind: input, shape index: {}]
  %s2 = inlined_call_operand.vmem [shape: f32[10,8], index: 2, kind: output, shape index: {}]
  %s3 = sld [smem:[#allocation0]]
  $region18: #{tpu_custom_call.1} parent=0
    _
  %s5 = ssub.s32 1, %s3
  %s6 = scalar_select 0, %s5, %s3
  // Predicated region
  $region2: #{tpu_custom_call.1} parent=0 // pred_check
    _
  $region3: #{tpu_custom_call.1} parent=0 // pred_check_branch
    %8 = sbr.rel (0) target = $region5
  $region4: #{tpu_custom_call.1} parent=0 // pred_region
    _
  $region5: #{tpu_custom_call.1} parent=0 // pred_fallthru
    _
  // Predicated region
  $region6: #{tpu_custom_call.1} parent=0 // pred_check
    _
  $region7: #{tpu_custom_call.1} parent=0 // pred_check_branch
    %10 = sbr.rel (0) target = $region9
  $region8: #{tpu_custom_call.1} parent=0 // pred_region
    _
  $region9: #{tpu_custom_call.1} parent=0 // pred_fallthru
    _
  %v11 = vld [vmem:[%s1] sm:$0xff]
  %v12 = vld [vmem:[%s1 + $0x8] sm:$0xff]
  %v13 = vld [vmem:[%s1 + $0x10] sm:$0xff]
  %v14 = vld [vmem:[%s1 + $0x18] sm:$0xff]
  %v15 = vld [vmem:[%s1 + $0x20] sm:$0x1]
  %v16 = vld [vmem:[%s0] sm:$0xff]
  %v17 = vld [vmem:[%s0 + $0x8] sm:$0x3]
  %v18 = vlaneseq
  %v19 = vshrl.u32 %v18, 7
  %v20 = vsub.s32 0, %v19
  %v21 = vrot.slane %v15, %v20
  %vm22 = vcmask 261120
  %v24 = vsel %vm22, %v16, 0
  %v27 = vsel %vm22, %v17, 0
  %29 = vmatprep.subr.mxu0 0.0
  %30 = vmatpush1.msra.mxu0 0.0
  %31 = vmatprep.subr.mxu0 0.0
  %32 = vmatpush1.msra.mxu0 0.0
  %33 = vmatprep.subr.mxu0 0.0
  %34 = vmatpush1.msra.mxu0 0.0
  %35 = vmatprep.subr.mxu0 0.0
  %36 = vmatpush1.msra.mxu0 0.0
  %37 = vmatprep.subr.mxu0 0.0
  %38 = vmatpush1.msra.mxu0 0.0
  %39 = vmatprep.subr.mxu0 0.0
  %40 = vmatpush1.msra.mxu0 0.0
  %41 = vmatprep.subr.mxu0 0.0
  %42 = vmatpush1.msra.mxu0 0.0
  %43 = vmatprep.subr.mxu0 0.0
  %44 = vmatpush1.msra.mxu0 0.0
  %45 = vmatprep.subr.mxu0 0.0
  %46 = vmatpush1.msra.mxu0 0.0
  %47 = vmatprep.subr.mxu0 0.0
  %48 = vmatpush1.msra.mxu0 0.0
  %49 = vmatprep.subr.mxu0 0.0
  %50 = vmatpush1.msra.mxu0 0.0
  %51 = vmatprep.subr.mxu0 0.0
  %52 = vmatpush1.msra.mxu0 0.0
  %53 = vmatprep.subr.mxu0 0.0
  %54 = vmatpush1.msra.mxu0 %v14
  %55 = vmatprep.subr.mxu0 0.0
  %56 = vmatpush1.msra.mxu0 %v13
  %57 = vmatprep.subr.mxu0 0.0
  %58 = vmatpush1.msra.mxu0 %v12
  %59 = vmatprep.subr.mxu0 0.0
  %60 = vmatpush1.msra.mxu0 %v11
  %61 = vmatprep.subr.mxu0 0.0
  %62 = vmatpush2.msra.mxu0 0.0
  %63 = vmatprep.subr.mxu0 0.0
  %64 = vmatpush2.msra.mxu0 0.0
  %65 = vmatprep.subr.mxu0 0.0
  %66 = vmatpush2.msra.mxu0 0.0
  %67 = vmatprep.subr.mxu0 0.0
  %68 = vmatpush2.msra.mxu0 0.0
  %69 = vmatprep.subr.mxu0 0.0
  %70 = vmatpush2.msra.mxu0 0.0
  %71 = vmatprep.subr.mxu0 0.0
  %72 = vmatpush2.msra.mxu0 0.0
  %73 = vmatprep.subr.mxu0 0.0
  %74 = vmatpush2.msra.mxu0 0.0
  %75 = vmatprep.subr.mxu0 0.0
  %76 = vmatpush2.msra.mxu0 0.0
  %77 = vmatprep.subr.mxu0 0.0
  %78 = vmatpush2.msra.mxu0 0.0
  %79 = vmatprep.subr.mxu0 0.0
  %80 = vmatpush2.msra.mxu0 0.0
  %81 = vmatprep.subr.mxu0 0.0
  %82 = vmatpush2.msra.mxu0 0.0
  %83 = vmatprep.subr.mxu0 0.0
  %84 = vmatpush2.msra.mxu0 0.0
  %85 = vmatprep.subr.mxu0 0.0
  %86 = vmatpush2.msra.mxu0 0.0
  %87 = vmatprep.subr.mxu0 0.0
  %88 = vmatpush2.msra.mxu0 0.0
  %89 = vmatprep.subr.mxu0 0.0
  %90 = vmatpush2.msra.mxu0 0.0
  %91 = vmatprep.subr.mxu0 0.0
  %92 = vmatpush2.msra.mxu0 0.0
  %93 = vmatprep.mubr.f32.mxu0 0.0
  %94 = vmatmul.mubr.f32.gmra.mxu0 %v24
  %v95 = vpop.f32.mrf.mxu0
  %v96 = vadd.f32 %v21, %v95
  %v97 = vpop.f32.mrf.mxu0
  %98 = vmatprep.mubr.f32.mxu0 0.0
  %99 = vmatmul.mubr.f32.gmra.mxu0 %v27
  %v100 = vpop.f32.mrf.mxu0
  %v101 = vadd.f32 %v21, %v100
  %v102 = vpop.f32.mrf.mxu0
  %103 = vdwg.mxu0
  %vm104 = vcmask 64512
  %105 = vst.msk [vmem:[%s2] sm:$0xff] %vm104, %v96
  %vm106 = vcmask 58368
  %107 = vst.msk [vmem:[%s2 + $0x8] sm:$0x3] %vm106, %v101
  // Predicated region
  $region10: #{tpu_custom_call.1} parent=0 // pred_check
    _
  $region11: #{tpu_custom_call.1} parent=0 // pred_check_branch
    %109 = sbr.rel (0) target = $region13
  $region12: #{tpu_custom_call.1} parent=0 // pred_region
    _
  $region13: #{tpu_custom_call.1} parent=0 // pred_fallthru
    _
  // Predicated region
  $region14: #{tpu_custom_call.1} parent=0 // pred_check
    _
  $region15: #{tpu_custom_call.1} parent=0 // pred_check_branch
    %111 = sbr.rel (0) target = $region17
  $region16: #{tpu_custom_call.1} parent=0 // pred_region
    _
  $region17: #{tpu_custom_call.1} parent=0 // pred_fallthru
    _

</llo_original>
